<compile_context>
chip_gen: v7x
topology: tpu7x:2x2x1
jax: 0.10.0
libtpu: 0.0.40
codegen_flags: <defaults>
</compile_context>

<pallas_src>
import functools

import jax
import jax.numpy as jnp
from jax.experimental import pallas as pl
from jax.experimental.pallas import tpu as pltpu


_LANES = 128                     # vreg lane width: output last dim multiple of this.
_BLOCK_M = 512                   # batch tile for the gridded paths.
_BLOCK_K = 512                   # default K tile for the K-tiled fallback.
_WHOLE_K_VMEM_BUDGET = 24 << 20  # whole-K footprint budget, sized for v7x (64 MiB VMEM).


def _round_up(n, multiple):
    return ((n + multiple - 1) // multiple) * multiple


def _vmem_limit(needed_bytes):
    # Explicit scoped-VMEM budget: computed footprint + headroom, clamped to a
    # range valid on every generation (v7x physical VMEM is 64 MiB).
    return int(min(max(needed_bytes + (4 << 20), 32 << 20), 64 << 20))


def _sqn_kernel(x_ref, w_ref, o_ref):
    # x: (M, K), w: (N_padded, K)  ->  o: (M, N_padded) = x @ w.T
    # Contract the last dims directly; no transpose materialized anywhere.
    o_ref[...] = jax.lax.dot_general(
        x_ref[...],
        w_ref[...],
        dimension_numbers=(((1,), (1,)), ((), ())),
        preferred_element_type=jnp.float32,
    ).astype(o_ref.dtype)


def _sqn_kernel_ktiled(x_ref, w_ref, o_ref, acc_ref):
    # Reduction over the K grid axis with an f32 VMEM accumulator.
    @pl.when(pl.program_id(1) == 0)
    def _():
        acc_ref[...] = jnp.zeros_like(acc_ref)

    acc_ref[...] += jax.lax.dot_general(
        x_ref[...],
        w_ref[...],
        dimension_numbers=(((1,), (1,)), ((), ())),
        preferred_element_type=jnp.float32,
    )

    @pl.when(pl.program_id(1) == pl.num_programs(1) - 1)
    def _():
        o_ref[...] = acc_ref[...].astype(o_ref.dtype)


def sqn_prepare_weight(weight, compute_dtype=None):
    """Pad the weight's output dim (rows) to a multiple of 128 lanes and
    optionally cast it. Call ONCE outside the hot loop (hoists an extra
    full-weight HBM pass out of every forward call)."""
    n_rows, _ = weight.shape
    n_padded = _round_up(n_rows, _LANES)
    if n_padded != n_rows:
        weight = jnp.pad(weight, ((0, n_padded - n_rows), (0, 0)))
    if compute_dtype is not None:
        weight = weight.astype(compute_dtype)
    return weight


def sqn_forward(x, weight, *, output_size=None, block_m=_BLOCK_M,
                block_k=None, compute_dtype=None, keep_padded=False):
    """Forward pass of SQN:  y = x @ weight.T   (bias-free nn.Linear).

    Args:
      x:             (batch, input_size) array.
      weight:        (output_size, input_size) array (PyTorch nn.Linear layout),
                     or an already lane-padded weight from sqn_prepare_weight.
      output_size:   logical output size; defaults to weight.shape[0].
      block_m:       batch tile (also the gridless small-batch cutoff).
      block_k:       force the K-tiled path with this K tile (must be a
                     multiple of 128 dividing input_size); None = automatic.
      compute_dtype: e.g. jnp.bfloat16 to halve operand HBM bytes (f32 accum).
      keep_padded:   return the lane-dense (batch, n_padded) buffer and skip
                     the lane-sparse trim copy.
    Returns:
      (batch, output_size) array with x's original dtype (or padded if asked).
    """
    batch, input_size = x.shape
    n_rows, in_w = weight.shape
    assert in_w == input_size
    out_dtype = x.dtype

    if output_size is None:
        output_size = n_rows

    # Lane-dense output: weight rows padded to a multiple of 128 so stores are
    # unmasked full-lane `vst`. No-op if the caller pre-padded via
    # sqn_prepare_weight (the preferred, hoisted form).
    n_padded = _round_up(n_rows, _LANES)
    if n_padded != n_rows:
        weight = jnp.pad(weight, ((0, n_padded - n_rows), (0, 0)))

    if compute_dtype is not None:
        x = x.astype(compute_dtype)
        weight = weight.astype(compute_dtype)

    x_size = jnp.dtype(x.dtype).itemsize
    w_size = jnp.dtype(weight.dtype).itemsize
    o_size = jnp.dtype(out_dtype).itemsize

    cost = pl.CostEstimate(
        flops=2 * batch * input_size * n_padded,
        transcendentals=0,
        bytes_accessed=(batch * input_size * x_size
                        + n_padded * input_size * w_size
                        + batch * n_padded * o_size),
    )

    if batch <= block_m:
        # ---- Small-batch path: single tile, no grid, no pipeline overhead.
        needed = (batch * input_size * x_size
                  + n_padded * input_size * w_size
                  + batch * n_padded * o_size)
        out = pl.pallas_call(
            _sqn_kernel,
            out_shape=jax.ShapeDtypeStruct((batch, n_padded), out_dtype),
            in_specs=[
                pl.BlockSpec(memory_space=pltpu.MemorySpace.VMEM),
                pl.BlockSpec(memory_space=pltpu.MemorySpace.VMEM),
            ],
            out_specs=pl.BlockSpec(memory_space=pltpu.MemorySpace.VMEM),
            compiler_params=pltpu.CompilerParams(
                vmem_limit_bytes=_vmem_limit(needed)),
            cost_estimate=cost,
        )(x, weight)
    else:
        # batch > block_m  =>  at least 2 grid steps, so the "parallel" M axis
        # gives both TensorCores work on v7x. Ragged edge block is masked by
        # Pallas (no wrapper-side pad of x).
        m_tiles = pl.cdiv(batch, block_m)

        whole_k_needed = (2 * block_m * input_size * x_size        # x double-buffered
                          + n_padded * input_size * w_size         # weight single-buffered
                          + 2 * block_m * n_padded * o_size)       # out double-buffered
        k_tileable = (input_size % _LANES == 0)
        use_k_tiling = k_tileable and (
            block_k is not None or whole_k_needed > _WHOLE_K_VMEM_BUDGET)

        if use_k_tiling:
            # ---- K-tiled path: reduction grid axis + f32 accumulator.
            bk = min(block_k if block_k is not None else _BLOCK_K, input_size)
            bk = (bk // _LANES) * _LANES
            while input_size % bk != 0:           # pick a 128-multiple dividing K
                bk -= _LANES
            k_tiles = input_size // bk
            needed = (2 * block_m * bk * x_size
                      + 2 * n_padded * bk * w_size
                      + 2 * block_m * n_padded * o_size
                      + block_m * n_padded * 4)   # f32 accumulator scratch
            out = pl.pallas_call(
                _sqn_kernel_ktiled,
                out_shape=jax.ShapeDtypeStruct((batch, n_padded), out_dtype),
                grid=(m_tiles, k_tiles),
                in_specs=[
                    pl.BlockSpec((block_m, bk), lambda i, k: (i, k)),
                    pl.BlockSpec((n_padded, bk), lambda i, k: (0, k)),
                ],
                out_specs=pl.BlockSpec((block_m, n_padded), lambda i, k: (i, 0)),
                scratch_shapes=[pltpu.VMEM((block_m, n_padded), jnp.float32)],
                compiler_params=pltpu.CompilerParams(
                    dimension_semantics=("parallel", "arbitrary"),
                    vmem_limit_bytes=_vmem_limit(needed)),
                cost_estimate=cost,
            )(x, weight)
        else:
            # ---- Whole-K path: tile batch only; resident weight single-buffered.
            # TODO(synk): if K is not a multiple of 128 AND the whole-K weight
            # exceeds the VMEM budget, an N-tiled fallback would be needed.
            out = pl.pallas_call(
                _sqn_kernel,
                out_shape=jax.ShapeDtypeStruct((batch, n_padded), out_dtype),
                grid=(m_tiles,),
                in_specs=[
                    pl.BlockSpec((block_m, input_size), lambda i: (i, 0)),
                    # Constant index_map -> single buffer (no useless 2x VMEM).
                    pl.BlockSpec((n_padded, input_size), lambda i: (0, 0),
                                 pipeline_mode=pl.Buffered(1)),
                ],
                out_specs=pl.BlockSpec((block_m, n_padded), lambda i: (i, 0)),
                compiler_params=pltpu.CompilerParams(
                    dimension_semantics=("parallel",),
                    vmem_limit_bytes=_vmem_limit(whole_k_needed)),
                cost_estimate=cost,
            )(x, weight)

    if keep_padded:
        return out
    return out[:, :output_size]


if __name__ == "__main__":
    key = jax.random.PRNGKey(0)
    kx, kw, kx2, kw2, kx3 = jax.random.split(key, 5)

    # Q-network shapes: state features (input_size) -> action values (output_size).
    batch, input_size, output_size = 8, 32, 16

    x = jax.random.normal(kx, (batch, input_size), dtype=jnp.float32)
    # Deterministic init matching nn.Linear default: U(-1/sqrt(in), 1/sqrt(in)).
    bound = 1.0 / jnp.sqrt(jnp.float32(input_size))
    weight = jax.random.uniform(
        kw, (output_size, input_size), dtype=jnp.float32,
        minval=-bound, maxval=bound,
    )

    # Hoist the weight lane-padding out of the hot path (done once).
    w_pad = sqn_prepare_weight(weight)
    fwd = jax.jit(functools.partial(sqn_forward, output_size=output_size))

    # --- Path 1: small batch -> gridless single-tile kernel.
    y = jax.block_until_ready(fwd(x, w_pad))
    y_ref = x @ weight.T
    assert y.shape == (batch, output_size)
    assert jnp.allclose(y, y_ref, atol=1e-5, rtol=1e-5)

    # --- Path 2: large ragged batch -> whole-K grid, single-buffered weight.
    big_batch = 1100
    xb = jax.random.normal(kx2, (big_batch, input_size), dtype=jnp.float32)
    yb = jax.block_until_ready(fwd(xb, w_pad))
    assert yb.shape == (big_batch, output_size)
    assert jnp.allclose(yb, xb @ weight.T, atol=1e-5, rtol=1e-5)

    # --- Path 3: bf16 operands (halved HBM traffic), f32 MXU accumulation.
    w_bf16 = sqn_prepare_weight(weight, compute_dtype=jnp.bfloat16)
    fwd_bf16 = jax.jit(functools.partial(
        sqn_forward, output_size=output_size, compute_dtype=jnp.bfloat16))
    yb16 = jax.block_until_ready(fwd_bf16(xb, w_bf16))
    assert yb16.shape == (big_batch, output_size)
    assert jnp.allclose(yb16, xb @ weight.T, atol=3e-2, rtol=3e-2)

    # --- Path 4: K-tiled fallback (forced via block_k) with a larger K.
    input_size2, output_size2 = 256, 16
    x2 = jax.random.normal(kx3, (big_batch, input_size2), dtype=jnp.float32)
    bound2 = 1.0 / jnp.sqrt(jnp.float32(input_size2))
    weight2 = jax.random.uniform(
        kw2, (output_size2, input_size2), dtype=jnp.float32,
        minval=-bound2, maxval=bound2,
    )
    w2_pad = sqn_prepare_weight(weight2)
    fwd_kt = jax.jit(functools.partial(
        sqn_forward, output_size=output_size2, block_k=128))
    y2 = jax.block_until_ready(fwd_kt(x2, w2_pad))
    assert y2.shape == (big_batch, output_size2)
    assert jnp.allclose(y2, x2 @ weight2.T, atol=1e-3, rtol=1e-3)

    print("KERNEL_OK")
</pallas_src>

<mosaic_0001>
module attributes {stable_mosaic.version = 11 : i64} {
  func.func @_sqn_kernel(%arg0: memref<8x32xf32, #tpu.memory_space<vmem>>, %arg1: memref<128x32xf32, #tpu.memory_space<vmem>>, %arg2: memref<8x128xf32, #tpu.memory_space<vmem>>) attributes {dimension_semantics = [], scalar_prefetch = 0 : i64, scratch_operands = 0 : i64, tpu.core_type = #tpu.core_type<tc>} {
    %c0 = arith.constant 0 : index
    %c0_0 = arith.constant 0 : index
    %0 = vector.load %arg0[%c0, %c0_0] : memref<8x32xf32, #tpu.memory_space<vmem>>, vector<8x32xf32>
    %c0_1 = arith.constant 0 : index
    %c0_2 = arith.constant 0 : index
    %1 = vector.load %arg1[%c0_1, %c0_2] : memref<128x32xf32, #tpu.memory_space<vmem>>, vector<128x32xf32>
    %cst = arith.constant dense<0.000000e+00> : vector<8x128xf32>
    %2 = tpu.matmul %0, %1, %cst {dimension_numbers = #tpu.dot_dimension_numbers<[1], [1], [0], [0], [0, 0, 1, 0], [], []>} : vector<8x32xf32>, vector<128x32xf32>, vector<8x128xf32> -> vector<8x128xf32>
    %c0_3 = arith.constant 0 : index
    %c0_4 = arith.constant 0 : index
    %3 = vector.load %arg2[%c0_3, %c0_4] : memref<8x128xf32, #tpu.memory_space<vmem>>, vector<8x128xf32>
    tpu.vector_store %arg2[%c0_3, %c0_4], %2 {strides = array<i32>} : memref<8x128xf32, #tpu.memory_space<vmem>>, vector<8x128xf32>,
    return
  }
}

</mosaic_0001>

<llo_original>
// kernel: sqn_forward.1
$region0: #{sqn_forward.1}
  #allocation0 [shape = 'u32[]', space=smem, size = 0x4, offset = 0x4, fixed_abs, tag = 'smem constant byte address 0x4 - core index']
  #allocation1 [shape = 'u32[144,128]{1,0:T(1,128)}', space=vmem, size = 0x12000, scoped, tag = 'internal scratch']
  %s0 = inlined_call_operand.vmem [shape: f32[8,32], index: 0, kind: input, shape index: {}]
  %s1 = inlined_call_operand.vmem [shape: f32[128,32], index: 1, kind: input, shape index: {}]
  %s2 = inlined_call_operand.hbm [shape: f32[8,128], index: 2, kind: output, shape index: {}]
  %s3 = sld [smem:[#allocation0]]
  $region18: #{sqn_forward.1} parent=0
    _
  %s5 = ssub.s32 1, %s3
  %s6 = scalar_select 0, %s5, %s3
  $region1: #{sqn_forward.1} parent=0
    #allocation2 [shape = 'u8[4096]{0}', space=vmem, size = 0x1000, scoped, tag = 'output window, operand 0, single buffered']
    #allocation3 [shape = 's32[1]{0}', space=sflag, size = 0x4, scoped, tag = 'scoped memory for sqn_forward.1']
    %7 = vsyncpa [#allocation3], 0
    // Predicated region
    $region2: #{sqn_forward.1} parent=1 // pred_check
      _
    $region3: #{sqn_forward.1} parent=1 // pred_check_branch
      %9 = sbr.rel (0) target = $region5
    $region4: #{sqn_forward.1} parent=1 // pred_region
      _
    $region5: #{sqn_forward.1} parent=1 // pred_fallthru
      _
    // Predicated region
    $region6: #{sqn_forward.1} parent=1 // pred_check
      _
    $region7: #{sqn_forward.1} parent=1 // pred_check_branch
      %11 = sbr.rel (0) target = $region9
    $region8: #{sqn_forward.1} parent=1 // pred_region
      _
    $region9: #{sqn_forward.1} parent=1 // pred_fallthru
      _
    %v12 = vld [vmem:[%s0] sm:$0xff]
    %v13 = vld [vmem:[%s1] sm:$0xff]
    %v14 = vld [vmem:[%s1 + $0x8] sm:$0xff]
    %v15 = vld [vmem:[%s1 + $0x10] sm:$0xff]
    %v16 = vld [vmem:[%s1 + $0x18] sm:$0xff]
    %v17 = vld [vmem:[%s1 + $0x20] sm:$0xff]
    %v18 = vld [vmem:[%s1 + $0x28] sm:$0xff]
    %v19 = vld [vmem:[%s1 + $0x30] sm:$0xff]
    %v20 = vld [vmem:[%s1 + $0x38] sm:$0xff]
    %v21 = vld [vmem:[%s1 + $0x40] sm:$0xff]
    %v22 = vld [vmem:[%s1 + $0x48] sm:$0xff]
    %v23 = vld [vmem:[%s1 + $0x50] sm:$0xff]
    %v24 = vld [vmem:[%s1 + $0x58] sm:$0xff]
    %v25 = vld [vmem:[%s1 + $0x60] sm:$0xff]
    %v26 = vld [vmem:[%s1 + $0x68] sm:$0xff]
    %v27 = vld [vmem:[%s1 + $0x70] sm:$0xff]
    %v28 = vld [vmem:[%s1 + $0x78] sm:$0xff]
    %vm29 = vcmask 261120
    %v31 = vsel %vm29, %v12, 0
    %v34 = vsel %vm29, %v13, 0
    %v37 = vsel %vm29, %v14, 0
    %v40 = vsel %vm29, %v15, 0
    %v43 = vsel %vm29, %v16, 0
    %v46 = vsel %vm29, %v17, 0
    %v49 = vsel %vm29, %v18, 0
    %v52 = vsel %vm29, %v19, 0
    %v55 = vsel %vm29, %v20, 0
    %v58 = vsel %vm29, %v21, 0
    %v61 = vsel %vm29, %v22, 0
    %v64 = vsel %vm29, %v23, 0
    %v67 = vsel %vm29, %v24, 0
    %v70 = vsel %vm29, %v25, 0
    %v73 = vsel %vm29, %v26, 0
    %v76 = vsel %vm29, %v27, 0
    %v79 = vsel %vm29, %v28, 0
    %81 = vmatprep.subr.mxu0 0.0
    %82 = vmatpush1.xpose.msra.mxu0 %v34
    %83 = vmatprep.subr.mxu0 0.0
    %84 = vmatpush1.xpose.msra.mxu0 %v37
    %85 = vmatprep.subr.mxu0 0.0
    %86 = vmatpush1.xpose.msra.mxu0 %v40
    %87 = vmatprep.subr.mxu0 0.0
    %88 = vmatpush1.xpose.msra.mxu0 %v43
    %89 = vmatprep.subr.mxu0 0.0
    %90 = vmatpush1.xpose.msra.mxu0 %v46
    %91 = vmatprep.subr.mxu0 0.0
    %92 = vmatpush1.xpose.msra.mxu0 %v49
    %93 = vmatprep.subr.mxu0 0.0
    %94 = vmatpush1.xpose.msra.mxu0 %v52
    %95 = vmatprep.subr.mxu0 0.0
    %96 = vmatpush1.xpose.msra.mxu0 %v55
    %97 = vmatprep.subr.mxu0 0.0
    %98 = vmatpush1.xpose.msra.mxu0 %v58
    %99 = vmatprep.subr.mxu0 0.0
    %100 = vmatpush1.xpose.msra.mxu0 %v61
    %101 = vmatprep.subr.mxu0 0.0
    %102 = vmatpush1.xpose.msra.mxu0 %v64
    %103 = vmatprep.subr.mxu0 0.0
    %104 = vmatpush1.xpose.msra.mxu0 %v67
    %105 = vmatprep.subr.mxu0 0.0
    %106 = vmatpush1.xpose.msra.mxu0 %v70
    %107 = vmatprep.subr.mxu0 0.0
    %108 = vmatpush1.xpose.msra.mxu0 %v73
    %109 = vmatprep.subr.mxu0 0.0
    %110 = vmatpush1.xpose.msra.mxu0 %v76
    %111 = vmatprep.subr.mxu0 0.0
    %112 = vmatpush1.xpose.msra.mxu0 %v79
    %113 = vmatprep.subr.mxu0 0.0
    %114 = vmatpush1.xpose.msra.mxu0 0.0
    %115 = vmatprep.subr.mxu0 0.0
    %116 = vmatpush1.xpose.msra.mxu0 0.0
    %117 = vmatprep.subr.mxu0 0.0
    %118 = vmatpush1.xpose.msra.mxu0 0.0
    %119 = vmatprep.subr.mxu0 0.0
    %120 = vmatpush1.xpose.msra.mxu0 0.0
    %121 = vmatprep.subr.mxu0 0.0
    %122 = vmatpush1.xpose.msra.mxu0 0.0
    %123 = vmatprep.subr.mxu0 0.0
    %124 = vmatpush1.xpose.msra.mxu0 0.0
    %125 = vmatprep.subr.mxu0 0.0
    %126 = vmatpush1.xpose.msra.mxu0 0.0
    %127 = vmatprep.subr.mxu0 0.0
    %128 = vmatpush1.xpose.msra.mxu0 0.0
    %129 = vmatprep.subr.mxu0 0.0
    %130 = vmatpush1.xpose.msra.mxu0 0.0
    %131 = vmatprep.subr.mxu0 0.0
    %132 = vmatpush1.xpose.msra.mxu0 0.0
    %133 = vmatprep.subr.mxu0 0.0
    %134 = vmatpush1.xpose.msra.mxu0 0.0
    %135 = vmatprep.subr.mxu0 0.0
    %136 = vmatpush1.xpose.msra.mxu0 0.0
    %137 = vmatprep.subr.mxu0 0.0
    %138 = vmatpush1.xpose.msra.mxu0 0.0
    %139 = vmatprep.subr.mxu0 0.0
    %140 = vmatpush1.xpose.msra.mxu0 0.0
    %141 = vmatprep.subr.mxu0 0.0
    %142 = vmatpush1.xpose.msra.mxu0 0.0
    %143 = vmatprep.subr.mxu0 0.0
    %144 = vmatpush1.xpose.msra.mxu0 0.0
    %145 = vmatprep.mubr.f32.mxu0 0.0
    %146 = vmatmul.mubr.f32.gmra.mrb[0].mxu0 %v31
    %v147 = vpop.f32.mrb[0].mxu0
    %v148 = vadd.f32 0.0, %v147
    %v149 = vpop.f32.mrb[0].mxu0
    %150 = vdwg.mxu0
    %151 = vst [vmem:[#allocation2] sm:$0xff] %v148
    // Predicated region
    $region10: #{sqn_forward.1} parent=1 // pred_check
      _
    $region11: #{sqn_forward.1} parent=1 // pred_check_branch
      %153 = sbr.rel (0) target = $region13
    $region12: #{sqn_forward.1} parent=1 // pred_region
      %s155 = ssub.s32 128, 128
      %156 = vsyncadd [#allocation3], %s155
      %s158 = sshll.u32 [#allocation2], 4
      %s159 = int_to_ptr.vmem [resolvable:$true] %s158
      %161 = dma.vmem_to_hbm [thread:$0]  %s159, 128, %s2, [#allocation3]
    $region13: #{sqn_forward.1} parent=1 // pred_fallthru
      _
    // Predicated region
    $region14: #{sqn_forward.1} parent=1 // pred_check
      _
    $region15: #{sqn_forward.1} parent=1 // pred_check_branch
      %163 = sbr.rel (0) target = $region17
    $region16: #{sqn_forward.1} parent=1 // pred_region
      %164 = dma.done [#allocation3], 128
    $region17: #{sqn_forward.1} parent=1 // pred_fallthru
      _
    %165 = vsyncpa [#allocation3], 1

</llo_original>
